<compile_context>
chip_gen: v7x
topology: tpu7x:2x2x1
jax: 0.10.0
libtpu: 0.0.40
codegen_flags: <defaults>
</compile_context>

<pallas_src>
import jax
import jax.numpy as jnp
from jax.experimental import pallas as pl
from jax.experimental.pallas import tpu as pltpu

NUM_LAYERS = 10
FEATURES = 10


def mymodule_kernel(x_ref, wc_ref, bc_ref, o_ref):
    # x_ref : (B, F)      float32
    # wc_ref: (L, F, F)   float32  combined, pre-transposed weights
    #                              wc[i] = (W[i//2] + W[i]).T
    # bc_ref: (L, F)      float32  combined biases  bc[i] = b[i//2] + b[i]
    # o_ref : (B, F)      float32
    x = x_ref[...]
    for i in range(NUM_LAYERS):  # tiny fixed trip-count -> static unroll
        x = jnp.dot(x, wc_ref[i], preferred_element_type=jnp.float32) + bc_ref[i]
    o_ref[...] = x.astype(o_ref.dtype)


def mymodule_forward(x, weights, biases):
    """x: (B, 10); weights: (10, 10, 10) in PyTorch (out, in) order; biases: (10, 10)."""
    # Host-side precompute (plain JAX, amortizable across forward calls):
    # fuse the two linears of each step into one affine map, then pre-transpose
    # so the kernel computes y = x @ Wt + b with no in-kernel transpose.
    idx_half = jnp.arange(NUM_LAYERS) // 2
    w_comb = weights[idx_half] + weights            # (L, out, in)
    b_comb = biases[idx_half] + biases              # (L, out)
    wt_comb = jnp.transpose(w_comb, (0, 2, 1))      # (L, in, out)

    return pl.pallas_call(
        mymodule_kernel,
        out_shape=jax.ShapeDtypeStruct(x.shape, jnp.float32),
        in_specs=[
            pl.BlockSpec(memory_space=pltpu.MemorySpace.VMEM),
            pl.BlockSpec(memory_space=pltpu.MemorySpace.VMEM),
            pl.BlockSpec(memory_space=pltpu.MemorySpace.VMEM),
        ],
        out_specs=pl.BlockSpec(memory_space=pltpu.MemorySpace.VMEM),
    )(x, wt_comb, b_comb)


def init_params(key):
    """Deterministic init mimicking nn.Linear's default U(-1/sqrt(in), 1/sqrt(in))."""
    kw, kb = jax.random.split(key)
    bound = 1.0 / jnp.sqrt(jnp.float32(FEATURES))
    weights = jax.random.uniform(
        kw, (NUM_LAYERS, FEATURES, FEATURES), jnp.float32, minval=-bound, maxval=bound
    )  # PyTorch layout: (out_features, in_features) per layer
    biases = jax.random.uniform(
        kb, (NUM_LAYERS, FEATURES), jnp.float32, minval=-bound, maxval=bound
    )
    return weights, biases


def reference_forward(x, weights, biases):
    """Pure-JAX reference of the (unfused) PyTorch forward, for a sanity check."""
    for i in range(NUM_LAYERS):
        j = i // 2
        x = (x @ weights[j].T + biases[j]) + (x @ weights[i].T + biases[i])
    return x


if __name__ == "__main__":
    key = jax.random.PRNGKey(0)
    kx, kp = jax.random.split(key)

    batch = 8
    x = jax.random.normal(kx, (batch, FEATURES), jnp.float32)
    weights, biases = init_params(kp)

    out = mymodule_forward(x, weights, biases)
    out = jax.block_until_ready(out)

    ref = reference_forward(x, weights, biases)
    assert out.shape == (batch, FEATURES)
    # Fusion reassociates f32 rounding (exact in real arithmetic); differences
    # are a few ulps, well within this tolerance.
    assert jnp.allclose(out, ref, rtol=1e-4, atol=1e-4), "mismatch vs reference"

    print("KERNEL_OK")
</pallas_src>

<mosaic_0001>
module attributes {stable_mosaic.version = 11 : i64} {
  func.func @mymodule_kernel(%arg0: memref<8x10xf32, #tpu.memory_space<vmem>>, %arg1: memref<10x10x10xf32, #tpu.memory_space<vmem>>, %arg2: memref<10x10xf32, #tpu.memory_space<vmem>>, %arg3: memref<8x10xf32, #tpu.memory_space<vmem>>) attributes {dimension_semantics = [], scalar_prefetch = 0 : i64, scratch_operands = 0 : i64, tpu.core_type = #tpu.core_type<tc>} {
    %c0 = arith.constant 0 : index
    %c0_0 = arith.constant 0 : index
    %0 = vector.load %arg0[%c0, %c0_0] : memref<8x10xf32, #tpu.memory_space<vmem>>, vector<8x10xf32>
    %c0_1 = arith.constant 0 : index
    %c0_2 = arith.constant 0 : index
    %c0_3 = arith.constant 0 : index
    %1 = vector.load %arg1[%c0_1, %c0_2, %c0_3] : memref<10x10x10xf32, #tpu.memory_space<vmem>>, vector<1x10x10xf32>
    %2 = vector.shape_cast %1 : vector<1x10x10xf32> to vector<10x10xf32>
    %cst = arith.constant dense<0.000000e+00> : vector<8x10xf32>
    %3 = tpu.matmul %0, %2, %cst {dimension_numbers = #tpu.dot_dimension_numbers<[1], [0], [0], [1], [0, 0, 1, 1], [], []>} : vector<8x10xf32>, vector<10x10xf32>, vector<8x10xf32> -> vector<8x10xf32>
    %c0_4 = arith.constant 0 : index
    %c0_5 = arith.constant 0 : index
    %4 = vector.load %arg2[%c0_4, %c0_5] : memref<10x10xf32, #tpu.memory_space<vmem>>, vector<1x10xf32>
    %5 = vector.shape_cast %4 : vector<1x10xf32> to vector<10xf32>
    %6 = vector.shape_cast %5 : vector<10xf32> to vector<1x10xf32>
    %7 = vector.broadcast %6 : vector<1x10xf32> to vector<8x10xf32>
    %8 = arith.addf %3, %7 : vector<8x10xf32>
    %c1 = arith.constant 1 : index
    %c0_6 = arith.constant 0 : index
    %c0_7 = arith.constant 0 : index
    %9 = vector.load %arg1[%c1, %c0_6, %c0_7] : memref<10x10x10xf32, #tpu.memory_space<vmem>>, vector<1x10x10xf32>
    %10 = vector.shape_cast %9 : vector<1x10x10xf32> to vector<10x10xf32>
    %cst_8 = arith.constant dense<0.000000e+00> : vector<8x10xf32>
    %11 = tpu.matmul %8, %10, %cst_8 {dimension_numbers = #tpu.dot_dimension_numbers<[1], [0], [0], [1], [0, 0, 1, 1], [], []>} : vector<8x10xf32>, vector<10x10xf32>, vector<8x10xf32> -> vector<8x10xf32>
    %c1_9 = arith.constant 1 : index
    %c0_10 = arith.constant 0 : index
    %12 = vector.load %arg2[%c1_9, %c0_10] : memref<10x10xf32, #tpu.memory_space<vmem>>, vector<1x10xf32>
    %13 = vector.shape_cast %12 : vector<1x10xf32> to vector<10xf32>
    %14 = vector.shape_cast %13 : vector<10xf32> to vector<1x10xf32>
    %15 = vector.broadcast %14 : vector<1x10xf32> to vector<8x10xf32>
    %16 = arith.addf %11, %15 : vector<8x10xf32>
    %c2 = arith.constant 2 : index
    %c0_11 = arith.constant 0 : index
    %c0_12 = arith.constant 0 : index
    %17 = vector.load %arg1[%c2, %c0_11, %c0_12] : memref<10x10x10xf32, #tpu.memory_space<vmem>>, vector<1x10x10xf32>
    %18 = vector.shape_cast %17 : vector<1x10x10xf32> to vector<10x10xf32>
    %cst_13 = arith.constant dense<0.000000e+00> : vector<8x10xf32>
    %19 = tpu.matmul %16, %18, %cst_13 {dimension_numbers = #tpu.dot_dimension_numbers<[1], [0], [0], [1], [0, 0, 1, 1], [], []>} : vector<8x10xf32>, vector<10x10xf32>, vector<8x10xf32> -> vector<8x10xf32>
    %c2_14 = arith.constant 2 : index
    %c0_15 = arith.constant 0 : index
    %20 = vector.load %arg2[%c2_14, %c0_15] : memref<10x10xf32, #tpu.memory_space<vmem>>, vector<1x10xf32>
    %21 = vector.shape_cast %20 : vector<1x10xf32> to vector<10xf32>
    %22 = vector.shape_cast %21 : vector<10xf32> to vector<1x10xf32>
    %23 = vector.broadcast %22 : vector<1x10xf32> to vector<8x10xf32>
    %24 = arith.addf %19, %23 : vector<8x10xf32>
    %c3 = arith.constant 3 : index
    %c0_16 = arith.constant 0 : index
    %c0_17 = arith.constant 0 : index
    %25 = vector.load %arg1[%c3, %c0_16, %c0_17] : memref<10x10x10xf32, #tpu.memory_space<vmem>>, vector<1x10x10xf32>
    %26 = vector.shape_cast %25 : vector<1x10x10xf32> to vector<10x10xf32>
    %cst_18 = arith.constant dense<0.000000e+00> : vector<8x10xf32>
    %27 = tpu.matmul %24, %26, %cst_18 {dimension_numbers = #tpu.dot_dimension_numbers<[1], [0], [0], [1], [0, 0, 1, 1], [], []>} : vector<8x10xf32>, vector<10x10xf32>, vector<8x10xf32> -> vector<8x10xf32>
    %c3_19 = arith.constant 3 : index
    %c0_20 = arith.constant 0 : index
    %28 = vector.load %arg2[%c3_19, %c0_20] : memref<10x10xf32, #tpu.memory_space<vmem>>, vector<1x10xf32>
    %29 = vector.shape_cast %28 : vector<1x10xf32> to vector<10xf32>
    %30 = vector.shape_cast %29 : vector<10xf32> to vector<1x10xf32>
    %31 = vector.broadcast %30 : vector<1x10xf32> to vector<8x10xf32>
    %32 = arith.addf %27, %31 : vector<8x10xf32>
    %c4 = arith.constant 4 : index
    %c0_21 = arith.constant 0 : index
    %c0_22 = arith.constant 0 : index
    %33 = vector.load %arg1[%c4, %c0_21, %c0_22] : memref<10x10x10xf32, #tpu.memory_space<vmem>>, vector<1x10x10xf32>
    %34 = vector.shape_cast %33 : vector<1x10x10xf32> to vector<10x10xf32>
    %cst_23 = arith.constant dense<0.000000e+00> : vector<8x10xf32>
    %35 = tpu.matmul %32, %34, %cst_23 {dimension_numbers = #tpu.dot_dimension_numbers<[1], [0], [0], [1], [0, 0, 1, 1], [], []>} : vector<8x10xf32>, vector<10x10xf32>, vector<8x10xf32> -> vector<8x10xf32>
    %c4_24 = arith.constant 4 : index
    %c0_25 = arith.constant 0 : index
    %36 = vector.load %arg2[%c4_24, %c0_25] : memref<10x10xf32, #tpu.memory_space<vmem>>, vector<1x10xf32>
    %37 = vector.shape_cast %36 : vector<1x10xf32> to vector<10xf32>
    %38 = vector.shape_cast %37 : vector<10xf32> to vector<1x10xf32>
    %39 = vector.broadcast %38 : vector<1x10xf32> to vector<8x10xf32>
    %40 = arith.addf %35, %39 : vector<8x10xf32>
    %c5 = arith.constant 5 : index
    %c0_26 = arith.constant 0 : index
    %c0_27 = arith.constant 0 : index
    %41 = vector.load %arg1[%c5, %c0_26, %c0_27] : memref<10x10x10xf32, #tpu.memory_space<vmem>>, vector<1x10x10xf32>
    %42 = vector.shape_cast %41 : vector<1x10x10xf32> to vector<10x10xf32>
    %cst_28 = arith.constant dense<0.000000e+00> : vector<8x10xf32>
    %43 = tpu.matmul %40, %42, %cst_28 {dimension_numbers = #tpu.dot_dimension_numbers<[1], [0], [0], [1], [0, 0, 1, 1], [], []>} : vector<8x10xf32>, vector<10x10xf32>, vector<8x10xf32> -> vector<8x10xf32>
    %c5_29 = arith.constant 5 : index
    %c0_30 = arith.constant 0 : index
    %44 = vector.load %arg2[%c5_29, %c0_30] : memref<10x10xf32, #tpu.memory_space<vmem>>, vector<1x10xf32>
    %45 = vector.shape_cast %44 : vector<1x10xf32> to vector<10xf32>
    %46 = vector.shape_cast %45 : vector<10xf32> to vector<1x10xf32>
    %47 = vector.broadcast %46 : vector<1x10xf32> to vector<8x10xf32>
    %48 = arith.addf %43, %47 : vector<8x10xf32>
    %c6 = arith.constant 6 : index
    %c0_31 = arith.constant 0 : index
    %c0_32 = arith.constant 0 : index
    %49 = vector.load %arg1[%c6, %c0_31, %c0_32] : memref<10x10x10xf32, #tpu.memory_space<vmem>>, vector<1x10x10xf32>
    %50 = vector.shape_cast %49 : vector<1x10x10xf32> to vector<10x10xf32>
    %cst_33 = arith.constant dense<0.000000e+00> : vector<8x10xf32>
    %51 = tpu.matmul %48, %50, %cst_33 {dimension_numbers = #tpu.dot_dimension_numbers<[1], [0], [0], [1], [0, 0, 1, 1], [], []>} : vector<8x10xf32>, vector<10x10xf32>, vector<8x10xf32> -> vector<8x10xf32>
    %c6_34 = arith.constant 6 : index
    %c0_35 = arith.constant 0 : index
    %52 = vector.load %arg2[%c6_34, %c0_35] : memref<10x10xf32, #tpu.memory_space<vmem>>, vector<1x10xf32>
    %53 = vector.shape_cast %52 : vector<1x10xf32> to vector<10xf32>
    %54 = vector.shape_cast %53 : vector<10xf32> to vector<1x10xf32>
    %55 = vector.broadcast %54 : vector<1x10xf32> to vector<8x10xf32>
    %56 = arith.addf %51, %55 : vector<8x10xf32>
    %c7 = arith.constant 7 : index
    %c0_36 = arith.constant 0 : index
    %c0_37 = arith.constant 0 : index
    %57 = vector.load %arg1[%c7, %c0_36, %c0_37] : memref<10x10x10xf32, #tpu.memory_space<vmem>>, vector<1x10x10xf32>
    %58 = vector.shape_cast %57 : vector<1x10x10xf32> to vector<10x10xf32>
    %cst_38 = arith.constant dense<0.000000e+00> : vector<8x10xf32>
    %59 = tpu.matmul %56, %58, %cst_38 {dimension_numbers = #tpu.dot_dimension_numbers<[1], [0], [0], [1], [0, 0, 1, 1], [], []>} : vector<8x10xf32>, vector<10x10xf32>, vector<8x10xf32> -> vector<8x10xf32>
    %c7_39 = arith.constant 7 : index
    %c0_40 = arith.constant 0 : index
    %60 = vector.load %arg2[%c7_39, %c0_40] : memref<10x10xf32, #tpu.memory_space<vmem>>, vector<1x10xf32>
    %61 = vector.shape_cast %60 : vector<1x10xf32> to vector<10xf32>
    %62 = vector.shape_cast %61 : vector<10xf32> to vector<1x10xf32>
    %63 = vector.broadcast %62 : vector<1x10xf32> to vector<8x10xf32>
    %64 = arith.addf %59, %63 : vector<8x10xf32>
    %c8 = arith.constant 8 : index
    %c0_41 = arith.constant 0 : index
    %c0_42 = arith.constant 0 : index
    %65 = vector.load %arg1[%c8, %c0_41, %c0_42] : memref<10x10x10xf32, #tpu.memory_space<vmem>>, vector<1x10x10xf32>
    %66 = vector.shape_cast %65 : vector<1x10x10xf32> to vector<10x10xf32>
    %cst_43 = arith.constant dense<0.000000e+00> : vector<8x10xf32>
    %67 = tpu.matmul %64, %66, %cst_43 {dimension_numbers = #tpu.dot_dimension_numbers<[1], [0], [0], [1], [0, 0, 1, 1], [], []>} : vector<8x10xf32>, vector<10x10xf32>, vector<8x10xf32> -> vector<8x10xf32>
    %c8_44 = arith.constant 8 : index
    %c0_45 = arith.constant 0 : index
    %68 = vector.load %arg2[%c8_44, %c0_45] : memref<10x10xf32, #tpu.memory_space<vmem>>, vector<1x10xf32>
    %69 = vector.shape_cast %68 : vector<1x10xf32> to vector<10xf32>
    %70 = vector.shape_cast %69 : vector<10xf32> to vector<1x10xf32>
    %71 = vector.broadcast %70 : vector<1x10xf32> to vector<8x10xf32>
    %72 = arith.addf %67, %71 : vector<8x10xf32>
    %c9 = arith.constant 9 : index
    %c0_46 = arith.constant 0 : index
    %c0_47 = arith.constant 0 : index
    %73 = vector.load %arg1[%c9, %c0_46, %c0_47] : memref<10x10x10xf32, #tpu.memory_space<vmem>>, vector<1x10x10xf32>
    %74 = vector.shape_cast %73 : vector<1x10x10xf32> to vector<10x10xf32>
    %cst_48 = arith.constant dense<0.000000e+00> : vector<8x10xf32>
    %75 = tpu.matmul %72, %74, %cst_48 {dimension_numbers = #tpu.dot_dimension_numbers<[1], [0], [0], [1], [0, 0, 1, 1], [], []>} : vector<8x10xf32>, vector<10x10xf32>, vector<8x10xf32> -> vector<8x10xf32>
    %c9_49 = arith.constant 9 : index
    %c0_50 = arith.constant 0 : index
    %76 = vector.load %arg2[%c9_49, %c0_50] : memref<10x10xf32, #tpu.memory_space<vmem>>, vector<1x10xf32>
    %77 = vector.shape_cast %76 : vector<1x10xf32> to vector<10xf32>
    %78 = vector.shape_cast %77 : vector<10xf32> to vector<1x10xf32>
    %79 = vector.broadcast %78 : vector<1x10xf32> to vector<8x10xf32>
    %80 = arith.addf %75, %79 : vector<8x10xf32>
    %c0_51 = arith.constant 0 : index
    %c0_52 = arith.constant 0 : index
    %81 = vector.load %arg3[%c0_51, %c0_52] : memref<8x10xf32, #tpu.memory_space<vmem>>, vector<8x10xf32>
    tpu.vector_store %arg3[%c0_51, %c0_52], %80 {strides = array<i32>} : memref<8x10xf32, #tpu.memory_space<vmem>>, vector<8x10xf32>,
    return
  }
}

</mosaic_0001>

<llo_original>
// kernel: tpu_custom_call.1
$region0: #{tpu_custom_call.1}
  #allocation0 [shape = 'u32[]', space=smem, size = 0x4, offset = 0x4, fixed_abs, tag = 'smem constant byte address 0x4 - core index']
  #allocation1 [shape = 'u32[144,128]{1,0:T(1,128)}', space=vmem, size = 0x12000, scoped, tag = 'internal scratch']
  %s0 = inlined_call_operand.hbm [shape: f32[8,10], index: 0, kind: input, shape index: {}]
  %s1 = inlined_call_operand.hbm [shape: f32[10,10,10], index: 1, kind: input, shape index: {}]
  %s2 = inlined_call_operand.hbm [shape: f32[10,10], index: 2, kind: input, shape index: {}]
  %s3 = inlined_call_operand.hbm [shape: f32[8,10], index: 3, kind: output, shape index: {}]
  %s4 = sld [smem:[#allocation0]]
  $region34: #{tpu_custom_call.1} parent=0
    _
  %s6 = ssub.s32 1, %s4
  %s7 = scalar_select 0, %s6, %s4
  $region1: #{tpu_custom_call.1} parent=0
    #allocation2 [shape = 'u8[4096]{0}', space=vmem, size = 0x1000, scoped, tag = 'input window, operand 0, single buffered']
    #allocation3 [shape = 's32[1]{0}', space=sflag, size = 0x4, scoped, tag = 'scoped memory for tpu_custom_call.1']
    #allocation4 [shape = 's32[1]{0}', space=sflag, size = 0x4, scoped, tag = 'scoped memory for tpu_custom_call.1']
    #allocation5 [shape = 'u8[81920]{0}', space=vmem, size = 0x14000, scoped, tag = 'input window, operand 1, single buffered']
    #allocation6 [shape = 's32[1]{0}', space=sflag, size = 0x4, scoped, tag = 'scoped memory for tpu_custom_call.1']
    #allocation7 [shape = 'u8[8192]{0}', space=vmem, size = 0x2000, scoped, tag = 'input window, operand 2, single buffered']
    #allocation8 [shape = 'u8[4096]{0}', space=vmem, size = 0x1000, scoped, tag = 'output window, operand 0, single buffered']
    %8 = vsyncpa [#allocation3], 0
    %9 = vsyncpa [#allocation6], 0
    %10 = vsyncpa [#allocation4], 0
    // Predicated region
    $region2: #{tpu_custom_call.1} parent=1 // pred_check
      _
    $region3: #{tpu_custom_call.1} parent=1 // pred_check_branch
      %12 = sbr.rel (0) target = $region5
    $region4: #{tpu_custom_call.1} parent=1 // pred_region
      %s14 = ssub.s32 128, 128
      %15 = vsyncadd [#allocation3], %s14
      %s17 = sshll.u32 [#allocation2], 4
      %s18 = int_to_ptr.vmem [resolvable:$true] %s17
      %20 = dma.hbm_to_vmem [thread:$0]  %s0, 128, %s18, [#allocation3]
    $region5: #{tpu_custom_call.1} parent=1 // pred_fallthru
      _
    // Predicated region
    $region6: #{tpu_custom_call.1} parent=1 // pred_check
      _
    $region7: #{tpu_custom_call.1} parent=1 // pred_check_branch
      %22 = sbr.rel (0) target = $region9
    $region8: #{tpu_custom_call.1} parent=1 // pred_region
      %s24 = ssub.s32 2560, 2560
      %25 = vsyncadd [#allocation6], %s24
      %s26 = sshll.u32 [#allocation5], 4
      %s27 = int_to_ptr.vmem [resolvable:$true] %s26
      %32 = dma.hbm_to_vmem [thread:$0]  %s1, 2560, %s27, [#allocation6], 128, 128, 8
    $region9: #{tpu_custom_call.1} parent=1 // pred_fallthru
      _
    // Predicated region
    $region10: #{tpu_custom_call.1} parent=1 // pred_check
      _
    $region11: #{tpu_custom_call.1} parent=1 // pred_check_branch
      %34 = sbr.rel (0) target = $region13
    $region12: #{tpu_custom_call.1} parent=1 // pred_region
      %s36 = ssub.s32 256, 256
      %37 = vsyncadd [#allocation6], %s36
      %s38 = sshll.u32 [#allocation7], 4
      %s39 = int_to_ptr.vmem [resolvable:$true] %s38
      %44 = dma.hbm_to_vmem [thread:$0]  %s2, 256, %s39, [#allocation6], 128, 128, 8
    $region13: #{tpu_custom_call.1} parent=1 // pred_fallthru
      _
    // Predicated region
    $region14: #{tpu_custom_call.1} parent=1 // pred_check
      _
    $region15: #{tpu_custom_call.1} parent=1 // pred_check_branch
      %46 = sbr.rel (0) target = $region17
    $region16: #{tpu_custom_call.1} parent=1 // pred_region
      %47 = dma.done [#allocation3], 128
    $region17: #{tpu_custom_call.1} parent=1 // pred_fallthru
      _
    // Predicated region
    $region18: #{tpu_custom_call.1} parent=1 // pred_check
      _
    $region19: #{tpu_custom_call.1} parent=1 // pred_check_branch
      %49 = sbr.rel (0) target = $region21
    $region20: #{tpu_custom_call.1} parent=1 // pred_region
      %50 = dma.done [#allocation6], 2560
    $region21: #{tpu_custom_call.1} parent=1 // pred_fallthru
      _
    // Predicated region
    $region22: #{tpu_custom_call.1} parent=1 // pred_check
      _
    $region23: #{tpu_custom_call.1} parent=1 // pred_check_branch
      %52 = sbr.rel (0) target = $region25
    $region24: #{tpu_custom_call.1} parent=1 // pred_region
      %53 = dma.done [#allocation6], 256
    $region25: #{tpu_custom_call.1} parent=1 // pred_fallthru
      _
    %v54 = vld [vmem:[#allocation2] sm:$0xff]
    %v55 = vld [vmem:[#allocation5] sm:$0xff]
    %v56 = vld [vmem:[#allocation5 + $0x8] sm:$0x3]
    %v57 = vld [vmem:[#allocation7] sm:$0x1]
    %v58 = vlaneseq
    %v59 = vshrl.u32 %v58, 7
    %v60 = vsub.s32 0, %v59
    %v61 = vrot.slane %v57, %v60
    %vm62 = vcmask 80896
    %v64 = vsel %vm62, %v54, 0
    %vm66 = vcmask 1041408
    %v68 = vsel %vm66, %v56, 0
    %70 = vmatprep.subr.mxu0 0.0
    %71 = vmatpush1.msra.mxu0 %v55
    %72 = vmatprep.subr.mxu0 0.0
    %73 = vmatpush1.msra.mxu0 %v68
    %74 = vmatprep.subr.mxu0 0.0
    %75 = vmatpush1.msra.mxu0 0.0
    %76 = vmatprep.subr.mxu0 0.0
    %77 = vmatpush1.msra.mxu0 0.0
    %78 = vmatprep.subr.mxu0 0.0
    %79 = vmatpush1.msra.mxu0 0.0
    %80 = vmatprep.subr.mxu0 0.0
    %81 = vmatpush1.msra.mxu0 0.0
    %82 = vmatprep.subr.mxu0 0.0
    %83 = vmatpush1.msra.mxu0 0.0
    %84 = vmatprep.subr.mxu0 0.0
    %85 = vmatpush1.msra.mxu0 0.0
    %86 = vmatprep.subr.mxu0 0.0
    %87 = vmatpush1.msra.mxu0 0.0
    %88 = vmatprep.subr.mxu0 0.0
    %89 = vmatpush1.msra.mxu0 0.0
    %90 = vmatprep.subr.mxu0 0.0
    %91 = vmatpush1.msra.mxu0 0.0
    %92 = vmatprep.subr.mxu0 0.0
    %93 = vmatpush1.msra.mxu0 0.0
    %94 = vmatprep.subr.mxu0 0.0
    %95 = vmatpush1.msra.mxu0 0.0
    %96 = vmatprep.subr.mxu0 0.0
    %97 = vmatpush1.msra.mxu0 0.0
    %98 = vmatprep.subr.mxu0 0.0
    %99 = vmatpush1.msra.mxu0 0.0
    %100 = vmatprep.subr.mxu0 0.0
    %101 = vmatpush1.msra.mxu0 0.0
    %102 = vmatprep.subr.mxu0 0.0
    %103 = vmatpush1.msra.mxu0 0.0
    %104 = vmatprep.subr.mxu0 0.0
    %105 = vmatpush1.msra.mxu0 0.0
    %106 = vmatprep.subr.mxu0 0.0
    %107 = vmatpush1.msra.mxu0 0.0
    %108 = vmatprep.subr.mxu0 0.0
    %109 = vmatpush1.msra.mxu0 0.0
    %110 = vmatprep.subr.mxu0 0.0
    %111 = vmatpush1.msra.mxu0 0.0
    %112 = vmatprep.subr.mxu0 0.0
    %113 = vmatpush1.msra.mxu0 0.0
    %114 = vmatprep.subr.mxu0 0.0
    %115 = vmatpush1.msra.mxu0 0.0
    %116 = vmatprep.subr.mxu0 0.0
    %117 = vmatpush1.msra.mxu0 0.0
    %118 = vmatprep.subr.mxu0 0.0
    %119 = vmatpush1.msra.mxu0 0.0
    %120 = vmatprep.subr.mxu0 0.0
    %121 = vmatpush1.msra.mxu0 0.0
    %122 = vmatprep.subr.mxu0 0.0
    %123 = vmatpush1.msra.mxu0 0.0
    %124 = vmatprep.subr.mxu0 0.0
    %125 = vmatpush1.msra.mxu0 0.0
    %126 = vmatprep.subr.mxu0 0.0
    %127 = vmatpush1.msra.mxu0 0.0
    %128 = vmatprep.subr.mxu0 0.0
    %129 = vmatpush1.msra.mxu0 0.0
    %130 = vmatprep.subr.mxu0 0.0
    %131 = vmatpush1.msra.mxu0 0.0
    %132 = vmatprep.subr.mxu0 0.0
    %133 = vmatpush1.msra.mxu0 0.0
    %134 = vmatprep.mubr.f32.mxu0 0.0
    %135 = vmatmul.mubr.f32.gmra.mrb[0].mxu0 %v64
    %v136 = vpop.f32.mrb[0].mxu0
    %v137 = vadd.f32 %v61, %v136
    %v138 = vpop.f32.mrb[0].mxu0
    %139 = vdwg.mxu0
    %s140 = scalar_lea.vmem [#allocation5], 16
    %v141 = vld [vmem:[%s140] sm:$0xff]
    %v142 = vld [vmem:[%s140 + $0x8] sm:$0x3]
    %v143 = vld [vmem:[#allocation7 + $0x1] sm:$0x1]
    %v144 = vlaneseq
    %v145 = vshrl.u32 %v144, 7
    %v146 = vsub.s32 0, %v145
    %v147 = vrot.slane %v143, %v146
    %v149 = vsel %vm62, %v137, 0
    %v152 = vsel %vm66, %v142, 0
    %154 = vmatprep.subr.mxu0 0.0
    %155 = vmatpush1.msra.mxu0 %v141
    %156 = vmatprep.subr.mxu0 0.0
    %157 = vmatpush1.msra.mxu0 %v152
    %158 = vmatprep.subr.mxu0 0.0
    %159 = vmatpush1.msra.mxu0 0.0
    %160 = vmatprep.subr.mxu0 0.0
    %161 = vmatpush1.msra.mxu0 0.0
    %162 = vmatprep.subr.mxu0 0.0
    %163 = vmatpush1.msra.mxu0 0.0
    %164 = vmatprep.subr.mxu0 0.0
    %165 = vmatpush1.msra.mxu0 0.0
    %166 = vmatprep.subr.mxu0 0.0
    %167 = vmatpush1.msra.mxu0 0.0
    %168 = vmatprep.subr.mxu0 0.0
    %169 = vmatpush1.msra.mxu0 0.0
    %170 = vmatprep.subr.mxu0 0.0
    %171 = vmatpush1.msra.mxu0 0.0
    %172 = vmatprep.subr.mxu0 0.0
    %173 = vmatpush1.msra.mxu0 0.0
    %174 = vmatprep.subr.mxu0 0.0
    %175 = vmatpush1.msra.mxu0 0.0
    %176 = vmatprep.subr.mxu0 0.0
    %177 = vmatpush1.msra.mxu0 0.0
    %178 = vmatprep.subr.mxu0 0.0
    %179 = vmatpush1.msra.mxu0 0.0
    %180 = vmatprep.subr.mxu0 0.0
    %181 = vmatpush1.msra.mxu0 0.0
    %182 = vmatprep.subr.mxu0 0.0
    %183 = vmatpush1.msra.mxu0 0.0
    %184 = vmatprep.subr.mxu0 0.0
    %185 = vmatpush1.msra.mxu0 0.0
    %186 = vmatprep.subr.mxu0 0.0
    %187 = vmatpush1.msra.mxu0 0.0
    %188 = vmatprep.subr.mxu0 0.0
    %189 = vmatpush1.msra.mxu0 0.0
    %190 = vmatprep.subr.mxu0 0.0
    %191 = vmatpush1.msra.mxu0 0.0
    %192 = vmatprep.subr.mxu0 0.0
    %193 = vmatpush1.msra.mxu0 0.0
    %194 = vmatprep.subr.mxu0 0.0
    %195 = vmatpush1.msra.mxu0 0.0
    %196 = vmatprep.subr.mxu0 0.0
    %197 = vmatpush1.msra.mxu0 0.0
    %198 = vmatprep.subr.mxu0 0.0
    %199 = vmatpush1.msra.mxu0 0.0
    %200 = vmatprep.subr.mxu0 0.0
    %201 = vmatpush1.msra.mxu0 0.0
    %202 = vmatprep.subr.mxu0 0.0
    %203 = vmatpush1.msra.mxu0 0.0
    %204 = vmatprep.subr.mxu0 0.0
    %205 = vmatpush1.msra.mxu0 0.0
    %206 = vmatprep.subr.mxu0 0.0
    %207 = vmatpush1.msra.mxu0 0.0
    %208 = vmatprep.subr.mxu0 0.0
    %209 = vmatpush1.msra.mxu0 0.0
    %210 = vmatprep.subr.mxu0 0.0
    %211 = vmatpush1.msra.mxu0 0.0
    %212 = vmatprep.subr.mxu0 0.0
    %213 = vmatpush1.msra.mxu0 0.0
    %214 = vmatprep.subr.mxu0 0.0
    %215 = vmatpush1.msra.mxu0 0.0
    %216 = vmatprep.subr.mxu0 0.0
    %217 = vmatpush1.msra.mxu0 0.0
    %218 = vmatprep.mubr.f32.mxu0 0.0
    %219 = vmatmul.mubr.f32.gmra.mrb[0].mxu0 %v149
    %v220 = vpop.f32.mrb[0].mxu0
    %v221 = vadd.f32 %v147, %v220
    %v222 = vpop.f32.mrb[0].mxu0
    %223 = vdwg.mxu0
    %s224 = scalar_lea.vmem [#allocation5], 32
    %v225 = vld [vmem:[%s224] sm:$0xff]
    %v226 = vld [vmem:[%s224 + $0x8] sm:$0x3]
    %v227 = vld [vmem:[#allocation7 + $0x2] sm:$0x1]
    %v228 = vlaneseq
    %v229 = vshrl.u32 %v228, 7
    %v230 = vsub.s32 0, %v229
    %v231 = vrot.slane %v227, %v230
    %v233 = vsel %vm62, %v221, 0
    %v236 = vsel %vm66, %v226, 0
    %238 = vmatprep.subr.mxu0 0.0
    %239 = vmatpush1.msra.mxu0 %v225
    %240 = vmatprep.subr.mxu0 0.0
    %241 = vmatpush1.msra.mxu0 %v236
    %242 = vmatprep.subr.mxu0 0.0
    %243 = vmatpush1.msra.mxu0 0.0
    %244 = vmatprep.subr.mxu0 0.0
    %245 = vmatpush1.msra.mxu0 0.0
    %246 = vmatprep.subr.mxu0 0.0
    %247 = vmatpush1.msra.mxu0 0.0
    %248 = vmatprep.subr.mxu0 0.0
    %249 = vmatpush1.msra.mxu0 0.0
    %250 = vmatprep.subr.mxu0 0.0
    %251 = vmatpush1.msra.mxu0 0.0
    %252 = vmatprep.subr.mxu0 0.0
    %253 = vmatpush1.msra.mxu0 0.0
    %254 = vmatprep.subr.mxu0 0.0
    %255 = vmatpush1.msra.mxu0 0.0
    %256 = vmatprep.subr.mxu0 0.0
    %257 = vmatpush1.msra.mxu0 0.0
    %258 = vmatprep.subr.mxu0 0.0
    %259 = vmatpush1.msra.mxu0 0.0
    %260 = vmatprep.subr.mxu0 0.0
    %261 = vmatpush1.msra.mxu0 0.0
    %262 = vmatprep.subr.mxu0 0.0
    %263 = vmatpush1.msra.mxu0 0.0
    %264 = vmatprep.subr.mxu0 0.0
    %265 = vmatpush1.msra.mxu0 0.0
    %266 = vmatprep.subr.mxu0 0.0
    %267 = vmatpush1.msra.mxu0 0.0
    %268 = vmatprep.subr.mxu0 0.0
    %269 = vmatpush1.msra.mxu0 0.0
    %270 = vmatprep.subr.mxu0 0.0
    %271 = vmatpush1.msra.mxu0 0.0
    %272 = vmatprep.subr.mxu0 0.0
    %273 = vmatpush1.msra.mxu0 0.0
    %274 = vmatprep.subr.mxu0 0.0
    %275 = vmatpush1.msra.mxu0 0.0
    %276 = vmatprep.subr.mxu0 0.0
    %277 = vmatpush1.msra.mxu0 0.0
    %278 = vmatprep.subr.mxu0 0.0
    %279 = vmatpush1.msra.mxu0 0.0
    %280 = vmatprep.subr.mxu0 0.0
    %281 = vmatpush1.msra.mxu0 0.0
    %282 = vmatprep.subr.mxu0 0.0
    %283 = vmatpush1.msra.mxu0 0.0
    %284 = vmatprep.subr.mxu0 0.0
    %285 = vmatpush1.msra.mxu0 0.0
    %286 = vmatprep.subr.mxu0 0.0
    %287 = vmatpush1.msra.mxu0 0.0
    %288 = vmatprep.subr.mxu0 0.0
    %289 = vmatpush1.msra.mxu0 0.0
    %290 = vmatprep.subr.mxu0 0.0
    %291 = vmatpush1.msra.mxu0 0.0
    %292 = vmatprep.subr.mxu0 0.0
    %293 = vmatpush1.msra.mxu0 0.0
    %294 = vmatprep.subr.mxu0 0.0
    %295 = vmatpush1.msra.mxu0 0.0
    %296 = vmatprep.subr.mxu0 0.0
    %297 = vmatpush1.msra.mxu0 0.0
    %298 = vmatprep.subr.mxu0 0.0
    %299 = vmatpush1.msra.mxu0 0.0
    %300 = vmatprep.subr.mxu0 0.0
    %301 = vmatpush1.msra.mxu0 0.0
    %302 = vmatprep.mubr.f32.mxu0 0.0
    %303 = vmatmul.mubr.f32.gmra.mrb[0].mxu0 %v233
    %v304 = vpop.f32.mrb[0].mxu0
    %v305 = vadd.f32 %v231, %v304
    %v306 = vpop.f32.mrb[0].mxu0
    %307 = vdwg.mxu0
    %s308 = scalar_lea.vmem [#allocation5], 48
    %v309 = vld [vmem:[%s308] sm:$0xff]
    %v310 = vld [vmem:[%s308 + $0x8] sm:$0x3]
    %v311 = vld [vmem:[#allocation7 + $0x3] sm:$0x1]
    %v312 = vlaneseq
    %v313 = vshrl.u32 %v312, 7
    %v314 = vsub.s32 0, %v313
    %v315 = vrot.slane %v311, %v314
    %v317 = vsel %vm62, %v305, 0
    %v320 = vsel %vm66, %v310, 0
    %322 = vmatprep.subr.mxu0 0.0
    %323 = vmatpush1.msra.mxu0 %v309
    %324 = vmatprep.subr.mxu0 0.0
    %325 = vmatpush1.msra.mxu0 %v320
    %326 = vmatprep.subr.mxu0 0.0
    %327 = vmatpush1.msra.mxu0 0.0
    %328 = vmatprep.subr.mxu0 0.0
    %329 = vmatpush1.msra.mxu0 0.0
    %330 = vmatprep.subr.mxu0 0.0
    %331 = vmatpush1.msra.mxu0 0.0
    %332 = vmatprep.subr.mxu0 0.0
    %333 = vmatpush1.msra.mxu0 0.0
    %334 = vmatprep.subr.mxu0 0.0
    %335 = vmatpush1.msra.mxu0 0.0
    %336 = vmatprep.subr.mxu0 0.0
    %337 = vmatpush1.msra.mxu0 0.0
    %338 = vmatprep.subr.mxu0 0.0
    %339 = vmatpush1.msra.mxu0 0.0
    %340 = vmatprep.subr.mxu0 0.0
    %341 = vmatpush1.msra.mxu0 0.0
    %342 = vmatprep.subr.mxu0 0.0
    %343 = vmatpush1.msra.mxu0 0.0
    %344 = vmatprep.subr.mxu0 0.0
    %345 = vmatpush1.msra.mxu0 0.0
    %346 = vmatprep.subr.mxu0 0.0
    %347 = vmatpush1.msra.mxu0 0.0
    %348 = vmatprep.subr.mxu0 0.0
    %349 = vmatpush1.msra.mxu0 0.0
    %350 = vmatprep.subr.mxu0 0.0
    %351 = vmatpush1.msra.mxu0 0.0
    %352 = vmatprep.subr.mxu0 0.0
    %353 = vmatpush1.msra.mxu0 0.0
    %354 = vmatprep.subr.mxu0 0.0
    %355 = vmatpush1.msra.mxu0 0.0
    %356 = vmatprep.subr.mxu0 0.0
    %357 = vmatpush1.msra.mxu0 0.0
    %358 = vmatprep.subr.mxu0 0.0
    %359 = vmatpush1.msra.mxu0 0.0
    %360 = vmatprep.subr.mxu0 0.0
    %361 = vmatpush1.msra.mxu0 0.0
    %362 = vmatprep.subr.mxu0 0.0
    %363 = vmatpush1.msra.mxu0 0.0
    %364 = vmatprep.subr.mxu0 0.0
    %365 = vmatpush1.msra.mxu0 0.0
    %366 = vmatprep.subr.mxu0 0.0
    %367 = vmatpush1.msra.mxu0 0.0
    %368 = vmatprep.subr.mxu0 0.0
    %369 = vmatpush1.msra.mxu0 0.0
    %370 = vmatprep.subr.mxu0 0.0
    %371 = vmatpush1.msra.mxu0 0.0
    %372 = vmatprep.subr.mxu0 0.0
    %373 = vmatpush1.msra.mxu0 0.0
    %374 = vmatprep.subr.mxu0 0.0
    %375 = vmatpush1.msra.mxu0 0.0
    %376 = vmatprep.subr.mxu0 0.0
    %377 = vmatpush1.msra.mxu0 0.0
    %378 = vmatprep.subr.mxu0 0.0
    %379 = vmatpush1.msra.mxu0 0.0
    %380 = vmatprep.subr.mxu0 0.0
    %381 = vmatpush1.msra.mxu0 0.0
    %382 = vmatprep.subr.mxu0 0.0
    %383 = vmatpush1.msra.mxu0 0.0
    %384 = vmatprep.subr.mxu0 0.0
    %385 = vmatpush1.msra.mxu0 0.0
    %386 = vmatprep.mubr.f32.mxu0 0.0
    %387 = vmatmul.mubr.f32.gmra.mrb[0].mxu0 %v317
    %v388 = vpop.f32.mrb[0].mxu0
    %v389 = vadd.f32 %v315, %v388
    %v390 = vpop.f32.mrb[0].mxu0
    %391 = vdwg.mxu0
    %s392 = scalar_lea.vmem [#allocation5], 64
    %v393 = vld [vmem:[%s392] sm:$0xff]
    %v394 = vld [vmem:[%s392 + $0x8] sm:$0x3]
    %v395 = vld [vmem:[#allocation7 + $0x4] sm:$0x1]
    %v396 = vlaneseq
    %v397 = vshrl.u32 %v396, 7
    %v398 = vsub.s32 0, %v397
    %v399 = vrot.slane %v395, %v398
    %v401 = vsel %vm62, %v389, 0
    %v404 = vsel %vm66, %v394, 0
    %406 = vmatprep.subr.mxu0 0.0
    %407 = vmatpush1.msra.mxu0 %v393
    %408 = vmatprep.subr.mxu0 0.0
    %409 = vmatpush1.msra.mxu0 %v404
    %410 = vmatprep.subr.mxu0 0.0
    %411 = vmatpush1.msra.mxu0 0.0
    %412 = vmatprep.subr.mxu0 0.0
    %413 = vmatpush1.msra.mxu0 0.0
    %414 = vmatprep.subr.mxu0 0.0
    %415 = vmatpush1.msra.mxu0 0.0
    %416 = vmatprep.subr.mxu0 0.0
    %417 = vmatpush1.msra.mxu0 0.0
    %418 = vmatprep.subr.mxu0 0.0
    %419 = vmatpush1.msra.mxu0 0.0
    %420 = vmatprep.subr.mxu0 0.0
    %421 = vmatpush1.msra.mxu0 0.0
    %422 = vmatprep.subr.mxu0 0.0
    %423 = vmatpush1.msra.mxu0 0.0
    %424 = vmatprep.subr.mxu0 0.0
    %425 = vmatpush1.msra.mxu0 0.0
    %426 = vmatprep.subr.mxu0 0.0
    %427 = vmatpush1.msra.mxu0 0.0
    %428 = vmatprep.subr.mxu0 0.0
    %429 = vmatpush1.msra.mxu0 0.0
    %430 = vmatprep.subr.mxu0 0.0
    %431 = vmatpush1.msra.mxu0 0.0
    %432 = vmatprep.subr.mxu0 0.0
    %433 = vmatpush1.msra.mxu0 0.0
    %434 = vmatprep.subr.mxu0 0.0
    %435 = vmatpush1.msra.mxu0 0.0
    %436 = vmatprep.subr.mxu0 0.0
    %437 = vmatpush1.msra.mxu0 0.0
    %438 = vmatprep.subr.mxu0 0.0
    %439 = vmatpush1.msra.mxu0 0.0
    %440 = vmatprep.subr.mxu0 0.0
    %441 = vmatpush1.msra.mxu0 0.0
    %442 = vmatprep.subr.mxu0 0.0
    %443 = vmatpush1.msra.mxu0 0.0
    %444 = vmatprep.subr.mxu0 0.0
    %445 = vmatpush1.msra.mxu0 0.0
    %446 = vmatprep.subr.mxu0 0.0
    %447 = vmatpush1.msra.mxu0 0.0
    %448 = vmatprep.subr.mxu0 0.0
    %449 = vmatpush1.msra.mxu0 0.0
    %450 = vmatprep.subr.mxu0 0.0
    %451 = vmatpush1.msra.mxu0 0.0
    %452 = vmatprep.subr.mxu0 0.0
    %453 = vmatpush1.msra.mxu0 0.0
    %454 = vmatprep.subr.mxu0 0.0
    %455 = vmatpush1.msra.mxu0 0.0
    %456 = vmatprep.subr.mxu0 0.0
    %457 = vmatpush1.msra.mxu0 0.0
    %458 = vmatprep.subr.mxu0 0.0
    %459 = vmatpush1.msra.mxu0 0.0
    %460 = vmatprep.subr.mxu0 0.0
    %461 = vmatpush1.msra.mxu0 0.0
    %462 = vmatprep.subr.mxu0 0.0
    %463 = vmatpush1.msra.mxu0 0.0
    %464 = vmatprep.subr.mxu0 0.0
    %465 = vmatpush1.msra.mxu0 0.0
    %466 = vmatprep.subr.mxu0 0.0
    %467 = vmatpush1.msra.mxu0 0.0
    %468 = vmatprep.subr.mxu0 0.0
    %469 = vmatpush1.msra.mxu0 0.0
    %470 = vmatprep.mubr.f32.mxu0 0.0
    %471 = vmatmul.mubr.f32.gmra.mrb[0].mxu0 %v401
    %v472 = vpop.f32.mrb[0].mxu0
    %v473 = vadd.f32 %v399, %v472
    %v474 = vpop.f32.mrb[0].mxu0
    %475 = vdwg.mxu0
    %s476 = scalar_lea.vmem [#allocation5], 80
    %v477 = vld [vmem:[%s476] sm:$0xff]
    %v478 = vld [vmem:[%s476 + $0x8] sm:$0x3]
    %v479 = vld [vmem:[#allocation7 + $0x5] sm:$0x1]
    %v480 = vlaneseq
    %v481 = vshrl.u32 %v480, 7
    %v482 = vsub.s32 0, %v481
    %v483 = vrot.slane %v479, %v482
    %v485 = vsel %vm62, %v473, 0
    %v488 = vsel %vm66, %v478, 0
    %490 = vmatprep.subr.mxu0 0.0
    %491 = vmatpush1.msra.mxu0 %v477
    %492 = vmatprep.subr.mxu0 0.0
    %493 = vmatpush1.msra.mxu0 %v488
    %494 = vmatprep.subr.mxu0 0.0
    %495 = vmatpush1.msra.mxu0 0.0
    %496 = vmatprep.subr.mxu0 0.0
    %497 = vmatpush1.msra.mxu0 0.0
    %498 = vmatprep.subr.mxu0 0.0
    %499 = vmatpush1.msra.mxu0 0.0
    %500 = vmatprep.subr.mxu0 0.0
    %501 = vmatpush1.msra.mxu0 0.0
    %502 = vmatprep.subr.mxu0 0.0
    %503 = vmatpush1.msra.mxu0 0.0
    %504 = vmatprep.subr.mxu0 0.0
    %505 = vmatpush1.msra.mxu0 0.0
    %506 = vmatprep.subr.mxu0 0.0
    %507 = vmatpush1.msra.mxu0 0.0
    %508 = vmatprep.subr.mxu0 0.0
    %509 = vmatpush1.msra.mxu0 0.0
    %510 = vmatprep.subr.mxu0 0.0
    %511 = vmatpush1.msra.mxu0 0.0
    %512 = vmatprep.subr.mxu0 0.0
    %513 = vmatpush1.msra.mxu0 0.0
    %514 = vmatprep.subr.mxu0 0.0
    %515 = vmatpush1.msra.mxu0 0.0
    %516 = vmatprep.subr.mxu0 0.0
    %517 = vmatpush1.msra.mxu0 0.0
    %518 = vmatprep.subr.mxu0 0.0
    %519 = vmatpush1.msra.mxu0 0.0
    %520 = vmatprep.subr.mxu0 0.0
    %521 = vmatpush1.msra.mxu0 0.0
    %522 = vmatprep.subr.mxu0 0.0
    %523 = vmatpush1.msra.mxu0 0.0
    %524 = vmatprep.subr.mxu0 0.0
    %525 = vmatpush1.msra.mxu0 0.0
    %526 = vmatprep.subr.mxu0 0.0
    %527 = vmatpush1.msra.mxu0 0.0
    %528 = vmatprep.subr.mxu0 0.0
    %529 = vmatpush1.msra.mxu0 0.0
    %530 = vmatprep.subr.mxu0 0.0
    %531 = vmatpush1.msra.mxu0 0.0
    %532 = vmatprep.subr.mxu0 0.0
    %533 = vmatpush1.msra.mxu0 0.0
    %534 = vmatprep.subr.mxu0 0.0
    %535 = vmatpush1.msra.mxu0 0.0
    %536 = vmatprep.subr.mxu0 0.0
    %537 = vmatpush1.msra.mxu0 0.0
    %538 = vmatprep.subr.mxu0 0.0
    %539 = vmatpush1.msra.mxu0 0.0
    %540 = vmatprep.subr.mxu0 0.0
    %541 = vmatpush1.msra.mxu0 0.0
    %542 = vmatprep.subr.mxu0 0.0
    %543 = vmatpush1.msra.mxu0 0.0
    %544 = vmatprep.subr.mxu0 0.0
    %545 = vmatpush1.msra.mxu0 0.0
    %546 = vmatprep.subr.mxu0 0.0
    %547 = vmatpush1.msra.mxu0 0.0
    %548 = vmatprep.subr.mxu0 0.0
    %549 = vmatpush1.msra.mxu0 0.0
    %550 = vmatprep.subr.mxu0 0.0
    %551 = vmatpush1.msra.mxu0 0.0
    %552 = vmatprep.subr.mxu0 0.0
    %553 = vmatpush1.msra.mxu0 0.0
    %554 = vmatprep.mubr.f32.mxu0 0.0
    %555 = vmatmul.mubr.f32.gmra.mrb[0].mxu0 %v485
    %v556 = vpop.f32.mrb[0].mxu0
    %v557 = vadd.f32 %v483, %v556
    %v558 = vpop.f32.mrb[0].mxu0
    %559 = vdwg.mxu0
    %s560 = scalar_lea.vmem [#allocation5], 96
    %v561 = vld [vmem:[%s560] sm:$0xff]
    %v562 = vld [vmem:[%s560 + $0x8] sm:$0x3]
    %v563 = vld [vmem:[#allocation7 + $0x6] sm:$0x1]
    %v564 = vlaneseq
    %v565 = vshrl.u32 %v564, 7
    %v566 = vsub.s32 0, %v565
    %v567 = vrot.slane %v563, %v566
    %v569 = vsel %vm62, %v557, 0
    %v572 = vsel %vm66, %v562, 0
    %574 = vmatprep.subr.mxu0 0.0
    %575 = vmatpush1.msra.mxu0 %v561
    %576 = vmatprep.subr.mxu0 0.0
    %577 = vmatpush1.msra.mxu0 %v572
    %578 = vmatprep.subr.mxu0 0.0
    %579 = vmatpush1.msra.mxu0 0.0
    %580 = vmatprep.subr.mxu0 0.0
    %581 = vmatpush1.msra.mxu0 0.0
    %582 = vmatprep.subr.mxu0 0.0
    %583 = vmatpush1.msra.mxu0 0.0
    %584 = vmatprep.subr.mxu0 0.0
    %585 = vmatpush1.msra.mxu0 0.0
    %586 = vmatprep.subr.mxu0 0.0
    %587 = vmatpush1.msra.mxu0 0.0
    %588 = vmatprep.subr.mxu0 0.0
    %589 = vmatpush1.msra.mxu0 0.0
    %590 = vmatprep.subr.mxu0 0.0
    %591 = vmatpush1.msra.mxu0 0.0
    %592 = vmatprep.subr.mxu0 0.0
    %593 = vmatpush1.msra.mxu0 0.0
    %594 = vmatprep.subr.mxu0 0.0
    %595 = vmatpush1.msra.mxu0 0.0
    %596 = vmatprep.subr.mxu0 0.0
    %597 = vmatpush1.msra.mxu0 0.0
    %598 = vmatprep.subr.mxu0 0.0
    %599 = vmatpush1.msra.mxu0 0.0
    %600 = vmatprep.subr.mxu0 0.0
    %601 = vmatpush1.msra.mxu0 0.0
    %602 = vmatprep.subr.mxu0 0.0
    %603 = vmatpush1.msra.mxu0 0.0
    %604 = vmatprep.subr.mxu0 0.0
    %605 = vmatpush1.msra.mxu0 0.0
    %606 = vmatprep.subr.mxu0 0.0
    %607 = vmatpush1.msra.mxu0 0.0
    %608 = vmatprep.subr.mxu0 0.0
    %609 = vmatpush1.msra.mxu0 0.0
    %610 = vmatprep.subr.mxu0 0.0
    %611 = vmatpush1.msra.mxu0 0.0
    %612 = vmatprep.subr.mxu0 0.0
    %613 = vmatpush1.msra.mxu0 0.0
    %614 = vmatprep.subr.mxu0 0.0
    %615 = vmatpush1.msra.mxu0 0.0
    %616 = vmatprep.subr.mxu0 0.0
    %617 = vmatpush1.msra.mxu0 0.0
    %618 = vmatprep.subr.mxu0 0.0
    %619 = vmatpush1.msra.mxu0 0.0
    %620 = vmatprep.subr.mxu0 0.0
    %621 = vmatpush1.msra.mxu0 0.0
    %622 = vmatprep.subr.mxu0 0.0
    %623 = vmatpush1.msra.mxu0 0.0
    %624 = vmatprep.subr.mxu0 0.0
    %625 = vmatpush1.msra.mxu0 0.0
    %626 = vmatprep.subr.mxu0 0.0
    %627 = vmatpush1.msra.mxu0 0.0
    %628 = vmatprep.subr.mxu0 0.0
    %629 = vmatpush1.msra.mxu0 0.0
    %630 = vmatprep.subr.mxu0 0.0
    %631 = vmatpush1.msra.mxu0 0.0
    %632 = vmatprep.subr.mxu0 0.0
    %633 = vmatpush1.msra.mxu0 0.0
    %634 = vmatprep.subr.mxu0 0.0
    %635 = vmatpush1.msra.mxu0 0.0
    %636 = vmatprep.subr.mxu0 0.0
    %637 = vmatpush1.msra.mxu0 0.0
    %638 = vmatprep.mubr.f32.mxu0 0.0
    %639 = vmatmul.mubr.f32.gmra.mrb[0].mxu0 %v569
    %v640 = vpop.f32.mrb[0].mxu0
    %v641 = vadd.f32 %v567, %v640
    %v642 = vpop.f32.mrb[0].mxu0
    %643 = vdwg.mxu0
    %s644 = scalar_lea.vmem [#allocation5], 112
    %v645 = vld [vmem:[%s644] sm:$0xff]
    %v646 = vld [vmem:[%s644 + $0x8] sm:$0x3]
    %v647 = vld [vmem:[#allocation7 + $0x7] sm:$0x1]
    %v648 = vlaneseq
    %v649 = vshrl.u32 %v648, 7
    %v650 = vsub.s32 0, %v649
    %v651 = vrot.slane %v647, %v650
    %v653 = vsel %vm62, %v641, 0
    %v656 = vsel %vm66, %v646, 0
    %658 = vmatprep.subr.mxu0 0.0
    %659 = vmatpush1.msra.mxu0 %v645
    %660 = vmatprep.subr.mxu0 0.0
    %661 = vmatpush1.msra.mxu0 %v656
    %662 = vmatprep.subr.mxu0 0.0
    %663 = vmatpush1.msra.mxu0 0.0
    %664 = vmatprep.subr.mxu0 0.0
    %665 = vmatpush1.msra.mxu0 0.0
    %666 = vmatprep.subr.mxu0 0.0
    %667 = vmatpush1.msra.mxu0 0.0
    %668 = vmatprep.subr.mxu0 0.0
    %669 = vmatpush1.msra.mxu0 0.0
    %670 = vmatprep.subr.mxu0 0.0
    %671 = vmatpush1.msra.mxu0 0.0
    %672 = vmatprep.subr.mxu0 0.0
    %673 = vmatpush1.msra.mxu0 0.0
    %674 = vmatprep.subr.mxu0 0.0
    %675 = vmatpush1.msra.mxu0 0.0
    %676 = vmatprep.subr.mxu0 0.0
    %677 = vmatpush1.msra.mxu0 0.0
    %678 = vmatprep.subr.mxu0 0.0
    %679 = vmatpush1.msra.mxu0 0.0
    %680 = vmatprep.subr.mxu0 0.0
    %681 = vmatpush1.msra.mxu0 0.0
    %682 = vmatprep.subr.mxu0 0.0
    %683 = vmatpush1.msra.mxu0 0.0
    %684 = vmatprep.subr.mxu0 0.0
    %685 = vmatpush1.msra.mxu0 0.0
    %686 = vmatprep.subr.mxu0 0.0
    %687 = vmatpush1.msra.mxu0 0.0
    %688 = vmatprep.subr.mxu0 0.0
    %689 = vmatpush1.msra.mxu0 0.0
    %690 = vmatprep.subr.mxu0 0.0
    %691 = vmatpush1.msra.mxu0 0.0
    %692 = vmatprep.subr.mxu0 0.0
    %693 = vmatpush1.msra.mxu0 0.0
    %694 = vmatprep.subr.mxu0 0.0
    %695 = vmatpush1.msra.mxu0 0.0
    %696 = vmatprep.subr.mxu0 0.0
    %697 = vmatpush1.msra.mxu0 0.0
    %698 = vmatprep.subr.mxu0 0.0
    %699 = vmatpush1.msra.mxu0 0.0
    %700 = vmatprep.subr.mxu0 0.0
    %701 = vmatpush1.msra.mxu0 0.0
    %702 = vmatprep.subr.mxu0 0.0
    %703 = vmatpush1.msra.mxu0 0.0
    %704 = vmatprep.subr.mxu0 0.0
    %705 = vmatpush1.msra.mxu0 0.0
    %706 = vmatprep.subr.mxu0 0.0
    %707 = vmatpush1.msra.mxu0 0.0
    %708 = vmatprep.subr.mxu0 0.0
    %709 = vmatpush1.msra.mxu0 0.0
    %710 = vmatprep.subr.mxu0 0.0
    %711 = vmatpush1.msra.mxu0 0.0
    %712 = vmatprep.subr.mxu0 0.0
    %713 = vmatpush1.msra.mxu0 0.0
    %714 = vmatprep.subr.mxu0 0.0
    %715 = vmatpush1.msra.mxu0 0.0
    %716 = vmatprep.subr.mxu0 0.0
    %717 = vmatpush1.msra.mxu0 0.0
    %718 = vmatprep.subr.mxu0 0.0
    %719 = vmatpush1.msra.mxu0 0.0
    %720 = vmatprep.subr.mxu0 0.0
    %721 = vmatpush1.msra.mxu0 0.0
    %722 = vmatprep.mubr.f32.mxu0 0.0
    %723 = vmatmul.mubr.f32.gmra.mrb[0].mxu0 %v653
    %v724 = vpop.f32.mrb[0].mxu0
    %v725 = vadd.f32 %v651, %v724
    %v726 = vpop.f32.mrb[0].mxu0
    %727 = vdwg.mxu0
    %s728 = scalar_lea.vmem [#allocation5], 128
    %v729 = vld [vmem:[%s728] sm:$0xff]
    %v730 = vld [vmem:[%s728 + $0x8] sm:$0x3]
    %v731 = vld [vmem:[#allocation7 + $0x8] sm:$0x1]
    %v732 = vlaneseq
    %v733 = vshrl.u32 %v732, 7
    %v734 = vsub.s32 0, %v733
    %v735 = vrot.slane %v731, %v734
    %v737 = vsel %vm62, %v725, 0
    %v740 = vsel %vm66, %v730, 0
    %742 = vmatprep.subr.mxu0 0.0
    %743 = vmatpush1.msra.mxu0 %v729
    %744 = vmatprep.subr.mxu0 0.0
    %745 = vmatpush1.msra.mxu0 %v740
    %746 = vmatprep.subr.mxu0 0.0
    %747 = vmatpush1.msra.mxu0 0.0
    %748 = vmatprep.subr.mxu0 0.0
    %749 = vmatpush1.msra.mxu0 0.0
    %750 = vmatprep.subr.mxu0 0.0
    %751 = vmatpush1.msra.mxu0 0.0
    %752 = vmatprep.subr.mxu0 0.0
    %753 = vmatpush1.msra.mxu0 0.0
    %754 = vmatprep.subr.mxu0 0.0
    %755 = vmatpush1.msra.mxu0 0.0
    %756 = vmatprep.subr.mxu0 0.0
    %757 = vmatpush1.msra.mxu0 0.0
    %758 = vmatprep.subr.mxu0 0.0
    %759 = vmatpush1.msra.mxu0 0.0
    %760 = vmatprep.subr.mxu0 0.0
    %761 = vmatpush1.msra.mxu0 0.0
    %762 = vmatprep.subr.mxu0 0.0
    %763 = vmatpush1.msra.mxu0 0.0
    %764 = vmatprep.subr.mxu0 0.0
    %765 = vmatpush1.msra.mxu0 0.0
    %766 = vmatprep.subr.mxu0 0.0
    %767 = vmatpush1.msra.mxu0 0.0
    %768 = vmatprep.subr.mxu0 0.0
    %769 = vmatpush1.msra.mxu0 0.0
    %770 = vmatprep.subr.mxu0 0.0
    %771 = vmatpush1.msra.mxu0 0.0
    %772 = vmatprep.subr.mxu0 0.0
    %773 = vmatpush1.msra.mxu0 0.0
    %774 = vmatprep.subr.mxu0 0.0
    %775 = vmatpush1.msra.mxu0 0.0
    %776 = vmatprep.subr.mxu0 0.0
    %777 = vmatpush1.msra.mxu0 0.0
    %778 = vmatprep.subr.mxu0 0.0
    %779 = vmatpush1.msra.mxu0 0.0
    %780 = vmatprep.subr.mxu0 0.0
    %781 = vmatpush1.msra.mxu0 0.0
    %782 = vmatprep.subr.mxu0 0.0
    %783 = vmatpush1.msra.mxu0 0.0
    %784 = vmatprep.subr.mxu0 0.0
    %785 = vmatpush1.msra.mxu0 0.0
    %786 = vmatprep.subr.mxu0 0.0
    %787 = vmatpush1.msra.mxu0 0.0
    %788 = vmatprep.subr.mxu0 0.0
    %789 = vmatpush1.msra.mxu0 0.0
    %790 = vmatprep.subr.mxu0 0.0
    %791 = vmatpush1.msra.mxu0 0.0
    %792 = vmatprep.subr.mxu0 0.0
    %793 = vmatpush1.msra.mxu0 0.0
    %794 = vmatprep.subr.mxu0 0.0
    %795 = vmatpush1.msra.mxu0 0.0
    %796 = vmatprep.subr.mxu0 0.0
    %797 = vmatpush1.msra.mxu0 0.0
    %798 = vmatprep.subr.mxu0 0.0
    %799 = vmatpush1.msra.mxu0 0.0
    %800 = vmatprep.subr.mxu0 0.0
    %801 = vmatpush1.msra.mxu0 0.0
    %802 = vmatprep.subr.mxu0 0.0
    %803 = vmatpush1.msra.mxu0 0.0
    %804 = vmatprep.subr.mxu0 0.0
    %805 = vmatpush1.msra.mxu0 0.0
    %806 = vmatprep.mubr.f32.mxu0 0.0
    %807 = vmatmul.mubr.f32.gmra.mrb[0].mxu0 %v737
    %v808 = vpop.f32.mrb[0].mxu0
    %v809 = vadd.f32 %v735, %v808
    %v810 = vpop.f32.mrb[0].mxu0
    %811 = vdwg.mxu0
    %s812 = scalar_lea.vmem [#allocation5], 144
    %v813 = vld [vmem:[%s812] sm:$0xff]
    %v814 = vld [vmem:[%s812 + $0x8] sm:$0x3]
    %v815 = vld [vmem:[#allocation7 + $0x9] sm:$0x1]
    %v816 = vlaneseq
    %v817 = vshrl.u32 %v816, 7
    %v818 = vsub.s32 0, %v817
    %v819 = vrot.slane %v815, %v818
    %v821 = vsel %vm62, %v809, 0
    %v824 = vsel %vm66, %v814, 0
    %826 = vmatprep.subr.mxu0 0.0
    %827 = vmatpush1.msra.mxu0 %v813
    %828 = vmatprep.subr.mxu0 0.0
    %829 = vmatpush1.msra.mxu0 %v824
    %830 = vmatprep.subr.mxu0 0.0
    %831 = vmatpush1.msra.mxu0 0.0
    %832 = vmatprep.subr.mxu0 0.0
    %833 = vmatpush1.msra.mxu0 0.0
    %834 = vmatprep.subr.mxu0 0.0
    %835 = vmatpush1.msra.mxu0 0.0
    %836 = vmatprep.subr.mxu0 0.0
    %837 = vmatpush1.msra.mxu0 0.0
    %838 = vmatprep.subr.mxu0 0.0
    %839 = vmatpush1.msra.mxu0 0.0
    %840 = vmatprep.subr.mxu0 0.0
    %841 = vmatpush1.msra.mxu0 0.0
    %842 = vmatprep.subr.mxu0 0.0
    %843 = vmatpush1.msra.mxu0 0.0
    %844 = vmatprep.subr.mxu0 0.0
    %845 = vmatpush1.msra.mxu0 0.0
    %846 = vmatprep.subr.mxu0 0.0
    %847 = vmatpush1.msra.mxu0 0.0
    %848 = vmatprep.subr.mxu0 0.0
    %849 = vmatpush1.msra.mxu0 0.0
    %850 = vmatprep.subr.mxu0 0.0
    %851 = vmatpush1.msra.mxu0 0.0
    %852 = vmatprep.subr.mxu0 0.0
    %853 = vmatpush1.msra.mxu0 0.0
    %854 = vmatprep.subr.mxu0 0.0
    %855 = vmatpush1.msra.mxu0 0.0
    %856 = vmatprep.subr.mxu0 0.0
    %857 = vmatpush1.msra.mxu0 0.0
    %858 = vmatprep.subr.mxu0 0.0
    %859 = vmatpush1.msra.mxu0 0.0
    %860 = vmatprep.subr.mxu0 0.0
    %861 = vmatpush1.msra.mxu0 0.0
    %862 = vmatprep.subr.mxu0 0.0
    %863 = vmatpush1.msra.mxu0 0.0
    %864 = vmatprep.subr.mxu0 0.0
    %865 = vmatpush1.msra.mxu0 0.0
    %866 = vmatprep.subr.mxu0 0.0
    %867 = vmatpush1.msra.mxu0 0.0
    %868 = vmatprep.subr.mxu0 0.0
    %869 = vmatpush1.msra.mxu0 0.0
    %870 = vmatprep.subr.mxu0 0.0
    %871 = vmatpush1.msra.mxu0 0.0
    %872 = vmatprep.subr.mxu0 0.0
    %873 = vmatpush1.msra.mxu0 0.0
    %874 = vmatprep.subr.mxu0 0.0
    %875 = vmatpush1.msra.mxu0 0.0
    %876 = vmatprep.subr.mxu0 0.0
    %877 = vmatpush1.msra.mxu0 0.0
    %878 = vmatprep.subr.mxu0 0.0
    %879 = vmatpush1.msra.mxu0 0.0
    %880 = vmatprep.subr.mxu0 0.0
    %881 = vmatpush1.msra.mxu0 0.0
    %882 = vmatprep.subr.mxu0 0.0
    %883 = vmatpush1.msra.mxu0 0.0
    %884 = vmatprep.subr.mxu0 0.0
    %885 = vmatpush1.msra.mxu0 0.0
    %886 = vmatprep.subr.mxu0 0.0
    %887 = vmatpush1.msra.mxu0 0.0
    %888 = vmatprep.subr.mxu0 0.0
    %889 = vmatpush1.msra.mxu0 0.0
    %890 = vmatprep.mubr.f32.mxu0 0.0
    %891 = vmatmul.mubr.f32.gmra.mrb[0].mxu0 %v821
    %v892 = vpop.f32.mrb[0].mxu0
    %v893 = vadd.f32 %v819, %v892
    %v894 = vpop.f32.mrb[0].mxu0
    %895 = vdwg.mxu0
    %896 = vst.msk [vmem:[#allocation8] sm:$0xff] %vm62, %v893
    // Predicated region
    $region26: #{tpu_custom_call.1} parent=1 // pred_check
      _
    $region27: #{tpu_custom_call.1} parent=1 // pred_check_branch
      %898 = sbr.rel (0) target = $region29
    $region28: #{tpu_custom_call.1} parent=1 // pred_region
      %s900 = ssub.s32 128, 128
      %901 = vsyncadd [#allocation4], %s900
      %s903 = sshll.u32 [#allocation8], 4
      %s904 = int_to_ptr.vmem [resolvable:$true] %s903
      %906 = dma.vmem_to_hbm [thread:$0]  %s904, 128, %s3, [#allocation4]
    $region29: #{tpu_custom_call.1} parent=1 // pred_fallthru
      _
    // Predicated region
    $region30: #{tpu_custom_call.1} parent=1 // pred_check
      _
    $region31: #{tpu_custom_call.1} parent=1 // pred_check_branch
      %908 = sbr.rel (0) target = $region33
    $region32: #{tpu_custom_call.1} parent=1 // pred_region
      %909 = dma.done [#allocation4], 128
    $region33: #{tpu_custom_call.1} parent=1 // pred_fallthru
      _
    %910 = vsyncpa [#allocation3], 1
    %911 = vsyncpa [#allocation6], 1
    %912 = vsyncpa [#allocation4], 1

</llo_original>
